<compile_context>
chip_gen: v7x
topology: tpu7x:2x2x1
jax: 0.10.0
libtpu: 0.0.40
codegen_flags: <defaults>
</compile_context>

<pallas_src>
import jax
import jax.numpy as jnp
from jax.experimental import pallas as pl
from jax.experimental.pallas import tpu as pltpu


def _round_up(x, m):
    return ((x + m - 1) // m) * m


def max_pool_kernel(x_ref, o_ref, acc_ref):
    # x_ref:   (ROW_TILE, LANE_TILE) tile of the padded (B*C, H*W) activations
    # o_ref:   (ROW_TILE, 1)         per-row global max (written only on last step)
    # acc_ref: (ROW_TILE, LANE_TILE) running elementwise max accumulator (VMEM scratch)
    s = pl.program_id(1)

    @pl.when(s == 0)
    def _():
        # First spatial step for this row tile: initialize accumulator directly
        # from the tile (equivalent to a -inf init followed by a max).
        acc_ref[...] = x_ref[...]

    @pl.when(s > 0)
    def _():
        # Steady state: plain VPU elementwise max, pipelines cleanly under the DMA.
        acc_ref[...] = jnp.maximum(acc_ref[...], x_ref[...])

    @pl.when(s == pl.num_programs(1) - 1)
    def _():
        # Single cross-lane (XLU) reduction, epilogue only.
        o_ref[...] = jnp.max(acc_ref[...], axis=-1, keepdims=True)


def mlp_kernel(p_ref, w1_ref, b1_ref, w2_ref, b2_ref, o_ref):
    # p_ref: (B, C)  w1_ref: (C, Cr)  b1_ref: (1, Cr)  w2_ref: (Cr, C)  b2_ref: (1, C)
    pooled = p_ref[...]
    h = jnp.dot(pooled, w1_ref[...],
                preferred_element_type=jnp.float32) + b1_ref[...]
    h = jnp.maximum(h, 0.0)                                        # ReLU
    logits = jnp.dot(h, w2_ref[...],
                     preferred_element_type=jnp.float32) + b2_ref[...]
    o_ref[...] = jax.nn.sigmoid(logits).astype(o_ref.dtype)        # channel gate (B, C)


def channel_gate(x_nchw, w1, b1, w2, b2, *, max_row_tile=512, max_lane_tile=2048):
    """x_nchw: (B, C, H, W) float32; weights stored (in_features, out_features)."""
    B, C, H, W = x_nchw.shape
    HW = H * W
    BC = B * C

    # --- tile sizing -------------------------------------------------------
    # Lane tile: multiple of 128, capped so the x tile stays VMEM-friendly.
    lane_tile = min(_round_up(HW, 128), max_lane_tile)
    hw_pad = _round_up(HW, lane_tile)
    # Row tile: multiple of 8.
    row_tile = min(_round_up(BC, 8), max_row_tile)
    bc_pad = _round_up(BC, row_tile)

    # Pad the spatial axis with -inf (zero padding would corrupt the max for
    # all-negative rows); padded rows are sliced away afterwards.
    x2 = x_nchw.reshape(BC, HW)
    x2 = jnp.pad(x2, ((0, bc_pad - BC), (0, hw_pad - HW)),
                 constant_values=-jnp.inf)

    grid = (bc_pad // row_tile, hw_pad // lane_tile)

    # VMEM budget: x tile double-buffered (2x) + accumulator scratch (1x) + headroom.
    tile_bytes = row_tile * lane_tile * 4
    vmem_limit = min(max(4 * tile_bytes, 32 * 1024 * 1024), 64 * 1024 * 1024)

    pooled = pl.pallas_call(
        max_pool_kernel,
        out_shape=jax.ShapeDtypeStruct((bc_pad, 1), jnp.float32),
        grid_spec=pltpu.PrefetchScalarGridSpec(
            num_scalar_prefetch=0,
            grid=grid,
            in_specs=[pl.BlockSpec((row_tile, lane_tile), lambda r, s: (r, s))],
            out_specs=pl.BlockSpec((row_tile, 1), lambda r, s: (r, 0)),
            scratch_shapes=[pltpu.VMEM((row_tile, lane_tile), jnp.float32)],
        ),
        compiler_params=pltpu.CompilerParams(
            dimension_semantics=("parallel", "arbitrary"),
            vmem_limit_bytes=vmem_limit,
        ),
    )(x2)

    pooled = pooled[:BC, 0].reshape(B, C)

    # --- tiny MLP + sigmoid: runs exactly once, single VMEM block -----------
    gate = pl.pallas_call(
        mlp_kernel,
        out_shape=jax.ShapeDtypeStruct((B, C), jnp.float32),
        in_specs=[pl.BlockSpec(memory_space=pltpu.MemorySpace.VMEM)] * 5,
        out_specs=pl.BlockSpec(memory_space=pltpu.MemorySpace.VMEM),
    )(pooled, w1, b1.reshape(1, -1), w2, b2.reshape(1, -1))
    return gate


if __name__ == "__main__":
    # Small deterministic example consistent with the module:
    # gate_channels must be >= reduction_ratio (default 16) so the hidden dim is nonzero.
    B, C, H, W = 2, 32, 16, 16
    reduction_ratio = 16
    Cr = C // reduction_ratio  # 2

    key = jax.random.PRNGKey(0)
    kx, kw1, kb1, kw2, kb2 = jax.random.split(key, 5)

    x = jax.random.normal(kx, (B, C, H, W), dtype=jnp.float32)

    # Deterministic PyTorch-Linear-style init (uniform +/- 1/sqrt(fan_in)).
    # Weights stored as (in_features, out_features) so the kernel does `pooled @ W`.
    lim1 = 1.0 / jnp.sqrt(jnp.float32(C))
    lim2 = 1.0 / jnp.sqrt(jnp.float32(Cr))
    w1 = jax.random.uniform(kw1, (C, Cr), jnp.float32, -lim1, lim1)
    b1 = jax.random.uniform(kb1, (Cr,), jnp.float32, -lim1, lim1)
    w2 = jax.random.uniform(kw2, (Cr, C), jnp.float32, -lim2, lim2)
    b2 = jax.random.uniform(kb2, (C,), jnp.float32, -lim2, lim2)

    out = channel_gate(x, w1, b1, w2, b2)
    jax.block_until_ready(out)

    # Pure-JAX reference check of the same forward pass.
    pooled_ref = jnp.max(x.reshape(B, C, H * W), axis=-1)
    h_ref = jnp.maximum(pooled_ref @ w1 + b1, 0.0)
    ref = jax.nn.sigmoid(h_ref @ w2 + b2)
    assert out.shape == (B, C)
    assert jnp.allclose(out, ref, atol=1e-5, rtol=1e-5)

    print("KERNEL_OK")
</pallas_src>

<mosaic_0001>
module attributes {stable_mosaic.version = 11 : i64} {
  func.func @max_pool_kernel(%arg0: i32, %arg1: i32, %arg2: memref<64x256xf32, #tpu.memory_space<vmem>>, %arg3: memref<64x1xf32, #tpu.memory_space<vmem>>, %arg4: memref<64x256xf32, #tpu.memory_space<vmem>>) attributes {dimension_semantics = [#tpu.dimension_semantics<parallel>, #tpu.dimension_semantics<arbitrary>], iteration_bounds = array<i64: 1, 1>, scalar_prefetch = 0 : i64, scratch_operands = 1 : i64, tpu.core_type = #tpu.core_type<tc>, window_params = [{transform_indices = @transform_0, window_bounds = array<i64: 64, 256>}, {transform_indices = @transform_1, window_bounds = array<i64: 64, 1>}]} {
    %c0_i32 = arith.constant 0 : i32
    %0 = arith.cmpi eq, %arg1, %c0_i32 : i32
    %1 = arith.extui %0 : i1 to i32
    %c0_i32_0 = arith.constant 0 : i32
    %2 = arith.cmpi ne, %1, %c0_i32_0 : i32
    scf.if %2 {
      %c0 = arith.constant 0 : index
      %c0_5 = arith.constant 0 : index
      %9 = vector.load %arg2[%c0, %c0_5] : memref<64x256xf32, #tpu.memory_space<vmem>>, vector<64x256xf32>
      %c0_6 = arith.constant 0 : index
      %c0_7 = arith.constant 0 : index
      %10 = vector.load %arg4[%c0_6, %c0_7] : memref<64x256xf32, #tpu.memory_space<vmem>>, vector<64x256xf32>
      tpu.vector_store %arg4[%c0_6, %c0_7], %9 {strides = array<i32>} : memref<64x256xf32, #tpu.memory_space<vmem>>, vector<64x256xf32>,
    } else {
    }
    %c0_i32_1 = arith.constant 0 : i32
    %3 = arith.cmpi sgt, %arg1, %c0_i32_1 : i32
    %4 = arith.extui %3 : i1 to i32
    %c0_i32_2 = arith.constant 0 : i32
    %5 = arith.cmpi ne, %4, %c0_i32_2 : i32
    scf.if %5 {
      %c0 = arith.constant 0 : index
      %c0_5 = arith.constant 0 : index
      %9 = vector.load %arg4[%c0, %c0_5] : memref<64x256xf32, #tpu.memory_space<vmem>>, vector<64x256xf32>
      %c0_6 = arith.constant 0 : index
      %c0_7 = arith.constant 0 : index
      %10 = vector.load %arg2[%c0_6, %c0_7] : memref<64x256xf32, #tpu.memory_space<vmem>>, vector<64x256xf32>
      %11 = arith.maximumf %9, %10 : vector<64x256xf32>
      %c0_8 = arith.constant 0 : index
      %c0_9 = arith.constant 0 : index
      %12 = vector.load %arg4[%c0_8, %c0_9] : memref<64x256xf32, #tpu.memory_space<vmem>>, vector<64x256xf32>
      tpu.vector_store %arg4[%c0_8, %c0_9], %11 {strides = array<i32>} : memref<64x256xf32, #tpu.memory_space<vmem>>, vector<64x256xf32>,
    } else {
    }
    %c0_i32_3 = arith.constant 0 : i32
    %6 = arith.cmpi eq, %arg1, %c0_i32_3 : i32
    %7 = arith.extui %6 : i1 to i32
    %c0_i32_4 = arith.constant 0 : i32
    %8 = arith.cmpi ne, %7, %c0_i32_4 : i32
    scf.if %8 {
      %c0 = arith.constant 0 : index
      %c0_5 = arith.constant 0 : index
      %9 = vector.load %arg4[%c0, %c0_5] : memref<64x256xf32, #tpu.memory_space<vmem>>, vector<64x256xf32>
      %cst = arith.constant dense<0xFF800000> : vector<64xf32>
      %10 = vector.multi_reduction <maximumf>, %9, %cst [1] : vector<64x256xf32> to vector<64xf32>
      %11 = vector.shape_cast %10 : vector<64xf32> to vector<64x1xf32>
      %c0_6 = arith.constant 0 : index
      %c0_7 = arith.constant 0 : index
      %12 = vector.load %arg3[%c0_6, %c0_7] : memref<64x1xf32, #tpu.memory_space<vmem>>, vector<64x1xf32>
      tpu.vector_store %arg3[%c0_6, %c0_7], %11 {strides = array<i32>} : memref<64x1xf32, #tpu.memory_space<vmem>>, vector<64x1xf32>,
    } else {
    }
    return
  }
  func.func @transform_0(%arg0: i32, %arg1: i32) -> (i32, i32) {
    %c0_i32 = arith.constant 0 : i32
    return %arg0, %arg1 : i32, i32
  }
  func.func @transform_1(%arg0: i32, %arg1: i32) -> (i32, i32) {
    %c0_i32 = arith.constant 0 : i32
    %c0_i32_0 = arith.constant 0 : i32
    return %arg0, %c0_i32 : i32, i32
  }
}

</mosaic_0001>

<llo_original>
// kernel: tpu_custom_call.1
$region0: #{tpu_custom_call.1}
  #allocation0 [shape = 'u32[]', space=smem, size = 0x4, offset = 0x4, fixed_abs, tag = 'smem constant byte address 0x4 - core index']
  #allocation1 [shape = 'u32[144,128]{1,0:T(1,128)}', space=vmem, size = 0x12000, scoped, tag = 'internal scratch']
  #allocation2 [shape = 'f32[64,256]{1,0:T(8,128)}', space=vmem, size = 0x10000, scoped, tag = 'scratch operand']
  %s0 = inlined_call_operand.hbm [shape: f32[64,256], index: 0, kind: input, shape index: {}]
  %s1 = inlined_call_operand.vmem [shape: f32[64,1], index: 1, kind: output, shape index: {}]
  %s2 = sld [smem:[#allocation0]]
  $region30: #{tpu_custom_call.1} parent=0
    _
  %s4 = ssub.s32 1, %s2
  %s5 = scalar_select 0, %s4, %s2
  $region1: #{tpu_custom_call.1} parent=0
    #allocation3 [shape = 'u8[65536]{0}', space=vmem, size = 0x10000, scoped, tag = 'input window, operand 0, single buffered']
    #allocation4 [shape = 's32[1]{0}', space=sflag, size = 0x4, scoped, tag = 'scoped memory for tpu_custom_call.1']
    %6 = vsyncpa [#allocation4], 0
    // Predicated region
    $region2: #{tpu_custom_call.1} parent=1 // pred_check
      _
    $region3: #{tpu_custom_call.1} parent=1 // pred_check_branch
      %8 = sbr.rel (0) target = $region5
    $region4: #{tpu_custom_call.1} parent=1 // pred_region
      %s10 = ssub.s32 2048, 2048
      %11 = vsyncadd [#allocation4], %s10
      %s12 = sshll.u32 [#allocation3], 4
      %s13 = int_to_ptr.vmem [resolvable:$true] %s12
      %18 = dma.hbm_to_vmem [thread:$0]  %s0, 2048, %s13, [#allocation4], 256, 256, 16
    $region5: #{tpu_custom_call.1} parent=1 // pred_fallthru
      _
    // Predicated region
    $region6: #{tpu_custom_call.1} parent=1 // pred_check
      _
    $region7: #{tpu_custom_call.1} parent=1 // pred_check_branch
      %20 = sbr.rel (0) target = $region9
    $region8: #{tpu_custom_call.1} parent=1 // pred_region
      %21 = dma.done [#allocation4], 2048
    $region9: #{tpu_custom_call.1} parent=1 // pred_fallthru
      _
    %p22 = scmp.eq.s32.totalorder 0, 0
    // Predicated region
    $region10: #{tpu_custom_call.1} parent=1 // pred_check
      %p23 = pneg %p22
    $region11: #{tpu_custom_call.1} parent=1 // pred_check_branch
      %25 = sbr.rel (%p23) target = $region13
    $region12: #{tpu_custom_call.1} parent=1 // pred_region
      %v26 = vld [vmem:[#allocation3] sm:$0xff]
      %v27 = vld [vmem:[#allocation3 + $0x8] sm:$0xff]
      %v28 = vld [vmem:[#allocation3 + $0x10] sm:$0xff]
      %v29 = vld [vmem:[#allocation3 + $0x18] sm:$0xff]
      %v30 = vld [vmem:[#allocation3 + $0x20] sm:$0xff]
      %v31 = vld [vmem:[#allocation3 + $0x28] sm:$0xff]
      %v32 = vld [vmem:[#allocation3 + $0x30] sm:$0xff]
      %v33 = vld [vmem:[#allocation3 + $0x38] sm:$0xff]
      %v34 = vld [vmem:[#allocation3 + $0x40] sm:$0xff]
      %v35 = vld [vmem:[#allocation3 + $0x48] sm:$0xff]
      %v36 = vld [vmem:[#allocation3 + $0x50] sm:$0xff]
      %v37 = vld [vmem:[#allocation3 + $0x58] sm:$0xff]
      %v38 = vld [vmem:[#allocation3 + $0x60] sm:$0xff]
      %v39 = vld [vmem:[#allocation3 + $0x68] sm:$0xff]
      %v40 = vld [vmem:[#allocation3 + $0x70] sm:$0xff]
      %v41 = vld [vmem:[#allocation3 + $0x78] sm:$0xff]
      %42 = vst [vmem:[#allocation2] sm:$0xff] %v26
      %43 = vst [vmem:[#allocation2 + $0x8] sm:$0xff] %v27
      %44 = vst [vmem:[#allocation2 + $0x10] sm:$0xff] %v28
      %45 = vst [vmem:[#allocation2 + $0x18] sm:$0xff] %v29
      %46 = vst [vmem:[#allocation2 + $0x20] sm:$0xff] %v30
      %47 = vst [vmem:[#allocation2 + $0x28] sm:$0xff] %v31
      %48 = vst [vmem:[#allocation2 + $0x30] sm:$0xff] %v32
      %49 = vst [vmem:[#allocation2 + $0x38] sm:$0xff] %v33
      %50 = vst [vmem:[#allocation2 + $0x40] sm:$0xff] %v34
      %51 = vst [vmem:[#allocation2 + $0x48] sm:$0xff] %v35
      %52 = vst [vmem:[#allocation2 + $0x50] sm:$0xff] %v36
      %53 = vst [vmem:[#allocation2 + $0x58] sm:$0xff] %v37
      %54 = vst [vmem:[#allocation2 + $0x60] sm:$0xff] %v38
      %55 = vst [vmem:[#allocation2 + $0x68] sm:$0xff] %v39
      %56 = vst [vmem:[#allocation2 + $0x70] sm:$0xff] %v40
      %57 = vst [vmem:[#allocation2 + $0x78] sm:$0xff] %v41
    $region13: #{tpu_custom_call.1} parent=1 // pred_fallthru
      _
    %p58 = scmp.gt.s32.totalorder 0, 0
    // Predicated region
    $region14: #{tpu_custom_call.1} parent=1 // pred_check
      %p59 = pneg %p58
    $region15: #{tpu_custom_call.1} parent=1 // pred_check_branch
      %61 = sbr.rel (%p59) target = $region17
    $region16: #{tpu_custom_call.1} parent=1 // pred_region
      %v62 = vld [vmem:[#allocation2] sm:$0xff]
      %v63 = vld [vmem:[#allocation2 + $0x8] sm:$0xff]
      %v64 = vld [vmem:[#allocation2 + $0x10] sm:$0xff]
      %v65 = vld [vmem:[#allocation2 + $0x18] sm:$0xff]
      %v66 = vld [vmem:[#allocation2 + $0x20] sm:$0xff]
      %v67 = vld [vmem:[#allocation2 + $0x28] sm:$0xff]
      %v68 = vld [vmem:[#allocation2 + $0x30] sm:$0xff]
      %v69 = vld [vmem:[#allocation2 + $0x38] sm:$0xff]
      %v70 = vld [vmem:[#allocation2 + $0x40] sm:$0xff]
      %v71 = vld [vmem:[#allocation2 + $0x48] sm:$0xff]
      %v72 = vld [vmem:[#allocation2 + $0x50] sm:$0xff]
      %v73 = vld [vmem:[#allocation2 + $0x58] sm:$0xff]
      %v74 = vld [vmem:[#allocation2 + $0x60] sm:$0xff]
      %v75 = vld [vmem:[#allocation2 + $0x68] sm:$0xff]
      %v76 = vld [vmem:[#allocation2 + $0x70] sm:$0xff]
      %v77 = vld [vmem:[#allocation2 + $0x78] sm:$0xff]
      %v78 = vld [vmem:[#allocation3] sm:$0xff]
      %v79 = vld [vmem:[#allocation3 + $0x8] sm:$0xff]
      %v80 = vld [vmem:[#allocation3 + $0x10] sm:$0xff]
      %v81 = vld [vmem:[#allocation3 + $0x18] sm:$0xff]
      %v82 = vld [vmem:[#allocation3 + $0x20] sm:$0xff]
      %v83 = vld [vmem:[#allocation3 + $0x28] sm:$0xff]
      %v84 = vld [vmem:[#allocation3 + $0x30] sm:$0xff]
      %v85 = vld [vmem:[#allocation3 + $0x38] sm:$0xff]
      %v86 = vld [vmem:[#allocation3 + $0x40] sm:$0xff]
      %v87 = vld [vmem:[#allocation3 + $0x48] sm:$0xff]
      %v88 = vld [vmem:[#allocation3 + $0x50] sm:$0xff]
      %v89 = vld [vmem:[#allocation3 + $0x58] sm:$0xff]
      %v90 = vld [vmem:[#allocation3 + $0x60] sm:$0xff]
      %v91 = vld [vmem:[#allocation3 + $0x68] sm:$0xff]
      %v92 = vld [vmem:[#allocation3 + $0x70] sm:$0xff]
      %v93 = vld [vmem:[#allocation3 + $0x78] sm:$0xff]
      %v94 = vmax.f32 %v62, %v78
      %v95 = vmax.f32 %v63, %v79
      %v96 = vmax.f32 %v64, %v80
      %v97 = vmax.f32 %v65, %v81
      %v98 = vmax.f32 %v66, %v82
      %v99 = vmax.f32 %v67, %v83
      %v100 = vmax.f32 %v68, %v84
      %v101 = vmax.f32 %v69, %v85
      %v102 = vmax.f32 %v70, %v86
      %v103 = vmax.f32 %v71, %v87
      %v104 = vmax.f32 %v72, %v88
      %v105 = vmax.f32 %v73, %v89
      %v106 = vmax.f32 %v74, %v90
      %v107 = vmax.f32 %v75, %v91
      %v108 = vmax.f32 %v76, %v92
      %v109 = vmax.f32 %v77, %v93
      %110 = vst [vmem:[#allocation2] sm:$0xff] %v94
      %111 = vst [vmem:[#allocation2 + $0x8] sm:$0xff] %v95
      %112 = vst [vmem:[#allocation2 + $0x10] sm:$0xff] %v96
      %113 = vst [vmem:[#allocation2 + $0x18] sm:$0xff] %v97
      %114 = vst [vmem:[#allocation2 + $0x20] sm:$0xff] %v98
      %115 = vst [vmem:[#allocation2 + $0x28] sm:$0xff] %v99
      %116 = vst [vmem:[#allocation2 + $0x30] sm:$0xff] %v100
      %117 = vst [vmem:[#allocation2 + $0x38] sm:$0xff] %v101
      %118 = vst [vmem:[#allocation2 + $0x40] sm:$0xff] %v102
      %119 = vst [vmem:[#allocation2 + $0x48] sm:$0xff] %v103
      %120 = vst [vmem:[#allocation2 + $0x50] sm:$0xff] %v104
      %121 = vst [vmem:[#allocation2 + $0x58] sm:$0xff] %v105
      %122 = vst [vmem:[#allocation2 + $0x60] sm:$0xff] %v106
      %123 = vst [vmem:[#allocation2 + $0x68] sm:$0xff] %v107
      %124 = vst [vmem:[#allocation2 + $0x70] sm:$0xff] %v108
      %125 = vst [vmem:[#allocation2 + $0x78] sm:$0xff] %v109
    $region17: #{tpu_custom_call.1} parent=1 // pred_fallthru
      _
    // Predicated region
    $region18: #{tpu_custom_call.1} parent=1 // pred_check
      %p126 = pneg %p22
    $region19: #{tpu_custom_call.1} parent=1 // pred_check_branch
      %128 = sbr.rel (%p126) target = $region21
    $region20: #{tpu_custom_call.1} parent=1 // pred_region
      %v129 = vld [vmem:[#allocation2] sm:$0xff]
      %v130 = vld [vmem:[#allocation2 + $0x8] sm:$0xff]
      %v131 = vld [vmem:[#allocation2 + $0x10] sm:$0xff]
      %v132 = vld [vmem:[#allocation2 + $0x18] sm:$0xff]
      %v133 = vld [vmem:[#allocation2 + $0x20] sm:$0xff]
      %v134 = vld [vmem:[#allocation2 + $0x28] sm:$0xff]
      %v135 = vld [vmem:[#allocation2 + $0x30] sm:$0xff]
      %v136 = vld [vmem:[#allocation2 + $0x38] sm:$0xff]
      %v137 = vld [vmem:[#allocation2 + $0x40] sm:$0xff]
      %v138 = vld [vmem:[#allocation2 + $0x48] sm:$0xff]
      %v139 = vld [vmem:[#allocation2 + $0x50] sm:$0xff]
      %v140 = vld [vmem:[#allocation2 + $0x58] sm:$0xff]
      %v141 = vld [vmem:[#allocation2 + $0x60] sm:$0xff]
      %v142 = vld [vmem:[#allocation2 + $0x68] sm:$0xff]
      %v143 = vld [vmem:[#allocation2 + $0x70] sm:$0xff]
      %v144 = vld [vmem:[#allocation2 + $0x78] sm:$0xff]
      %v145 = vmax.f32 %v129, %v130
      %146 = vmax.xlane.f32.xlu0 %v145
      %v147 = vpop.xlane.xlu0 %146
      %v148 = vmax.f32 %v131, %v132
      %149 = vmax.xlane.f32.xlu0 %v148
      %v150 = vpop.xlane.xlu0 %149
      %v151 = vmax.f32 %v133, %v134
      %152 = vmax.xlane.f32.xlu0 %v151
      %v153 = vpop.xlane.xlu0 %152
      %v154 = vmax.f32 %v135, %v136
      %155 = vmax.xlane.f32.xlu0 %v154
      %v156 = vpop.xlane.xlu0 %155
      %v157 = vmax.f32 %v137, %v138
      %158 = vmax.xlane.f32.xlu0 %v157
      %v159 = vpop.xlane.xlu0 %158
      %v160 = vmax.f32 %v139, %v140
      %161 = vmax.xlane.f32.xlu0 %v160
      %v162 = vpop.xlane.xlu0 %161
      %v163 = vmax.f32 %v141, %v142
      %164 = vmax.xlane.f32.xlu0 %v163
      %v165 = vpop.xlane.xlu0 %164
      %v166 = vmax.f32 %v143, %v144
      %167 = vmax.xlane.f32.xlu0 %v166
      %v168 = vpop.xlane.xlu0 %167
      %vm169 = vcmask 7168
      %170 = vst.msk [vmem:[%s1] sm:$0xff] %vm169, %v147
      %171 = vst.msk [vmem:[%s1 + $0x8] sm:$0xff] %vm169, %v150
      %172 = vst.msk [vmem:[%s1 + $0x10] sm:$0xff] %vm169, %v153
      %173 = vst.msk [vmem:[%s1 + $0x18] sm:$0xff] %vm169, %v156
      %174 = vst.msk [vmem:[%s1 + $0x20] sm:$0xff] %vm169, %v159
      %175 = vst.msk [vmem:[%s1 + $0x28] sm:$0xff] %vm169, %v162
      %176 = vst.msk [vmem:[%s1 + $0x30] sm:$0xff] %vm169, %v165
      %177 = vst.msk [vmem:[%s1 + $0x38] sm:$0xff] %vm169, %v168
    $region21: #{tpu_custom_call.1} parent=1 // pred_fallthru
      _
    // Predicated region
    $region22: #{tpu_custom_call.1} parent=1 // pred_check
      _
    $region23: #{tpu_custom_call.1} parent=1 // pred_check_branch
      %179 = sbr.rel (0) target = $region25
    $region24: #{tpu_custom_call.1} parent=1 // pred_region
      _
    $region25: #{tpu_custom_call.1} parent=1 // pred_fallthru
      _
    // Predicated region
    $region26: #{tpu_custom_call.1} parent=1 // pred_check
      _
    $region27: #{tpu_custom_call.1} parent=1 // pred_check_branch
      %181 = sbr.rel (0) target = $region29
    $region28: #{tpu_custom_call.1} parent=1 // pred_region
      _
    $region29: #{tpu_custom_call.1} parent=1 // pred_fallthru
      _
    %182 = vsyncpa [#allocation4], 1

</llo_original>
